<compile_context>
chip_gen: v5e
topology: v5e:2x2
jax: 0.10.0
libtpu: 0.0.40
codegen_flags: <defaults>
</compile_context>

<pallas_src>
import numpy as np

import jax
import jax.numpy as jnp
from jax.experimental import pallas as pl
from jax.experimental.pallas import tpu as pltpu

_HIDDEN = 10          # hidden units of linear1 / inputs of linear2
_LANES = 128          # lane width of a vreg
_MAX_TILE_ROWS = 4096  # 4096*128*4B = 2 MiB per buffer (8 MiB double-buffered)


def _make_folded_kernel(signs):
    """Kernel with w2 folded into layer-1 coefficients.

    params_ref (SMEM, (21,) f32): [a(10) | c(10) | b2(1)] where
        a_j = w1_j * w2_j,  c_j = b1_j * w2_j.
    Per unit:  relu(x*w1_j + b1_j) * w2_j
             = max(x*a_j + c_j, 0)   if w2_j >= 0
             = min(x*a_j + c_j, 0)   if w2_j <  0
    signs[j] is the Python bool (w2_j >= 0), fixed at trace time.
    """
    def kernel(params_ref, x_ref, o_ref):
        x = x_ref[...]
        acc_even = None
        acc_odd = None
        for j in range(_HIDDEN):                              # static unroll
            t = x * params_ref[j] + params_ref[_HIDDEN + j]
            h = jnp.maximum(t, 0.0) if signs[j] else jnp.minimum(t, 0.0)
            if j % 2 == 0:
                acc_even = h if acc_even is None else acc_even + h
            else:
                acc_odd = h if acc_odd is None else acc_odd + h
        acc = acc_even if acc_odd is None else acc_even + acc_odd
        o_ref[...] = (acc + params_ref[2 * _HIDDEN]).astype(o_ref.dtype)
    return kernel


def _generic_kernel(params_ref, x_ref, o_ref):
    """Fallback when w2's sign is not known at trace time.

    params_ref (SMEM, (31,) f32): [w1(10) | b1(10) | w2(10) | b2(1)].
    """
    x = x_ref[...]
    acc_even = None
    acc_odd = None
    for j in range(_HIDDEN):                                  # static unroll
        h = jnp.maximum(x * params_ref[j] + params_ref[_HIDDEN + j], 0.0)
        h = h * params_ref[2 * _HIDDEN + j]
        if j % 2 == 0:
            acc_even = h if acc_even is None else acc_even + h
        else:
            acc_odd = h if acc_odd is None else acc_odd + h
    acc = acc_even if acc_odd is None else acc_even + acc_odd
    o_ref[...] = (acc + params_ref[3 * _HIDDEN]).astype(o_ref.dtype)


def _round_up(a, m):
    return -(-a // m) * m


def lmodule_forward(x, w1, b1, w2, b2):
    """Pallas equivalent of LModule.forward on x.view(-1, 1).

    x  : any shape -> flattened like `x.view(-1, 1)`
    w1 : (10, 1), b1 : (10,)   -- nn.Linear(1, 10)
    w2 : (1, 10), b2 : (1,)    -- nn.Linear(10, 1)
    returns (N, 1) float32
    """
    xf = x.reshape(-1).astype(jnp.float32)
    n = xf.shape[0]
    if n == 0:
        return jnp.zeros((0, 1), jnp.float32)

    # Lane-dense slab: (rows, 128). Only the sub-128 remainder is padded.
    rows = pl.cdiv(n, _LANES)
    padded = rows * _LANES != n
    if padded:
        xf = jnp.pad(xf, (0, rows * _LANES - n))      # <= 127 elements
    x2 = xf.reshape(rows, _LANES)

    # Tile: multiple of 8 sublanes, big enough to amortize per-step overhead,
    # small enough to double-buffer in VMEM and to give >=2 parallel steps
    # (both v7x TensorCores). Ragged last block handled by Pallas.
    if rows <= 8:
        tile_r = rows                                  # full-extent block
    else:
        tile_r = min(_MAX_TILE_ROWS, max(8, _round_up(pl.cdiv(rows, 2), 8)))
    grid = pl.cdiv(rows, tile_r)

    w1f = w1.reshape(-1).astype(jnp.float32)           # (10,)
    b1f = b1.reshape(-1).astype(jnp.float32)           # (10,)
    w2f = w2.reshape(-1).astype(jnp.float32)           # (10,)
    b2f = b2.reshape(-1).astype(jnp.float32)           # (1,)

    # Host-side w2 fold (inference fast path). Falls back to the generic
    # 5-op-per-unit kernel if the weights are traced (sign unknown).
    try:
        w2_host = np.asarray(jax.device_get(w2f))
        signs = tuple(bool(v >= 0.0) for v in w2_host)
    except Exception:
        signs = None

    if signs is not None:
        params = jnp.concatenate([w1f * w2f, b1f * w2f, b2f])   # (21,)
        kernel = _make_folded_kernel(signs)
    else:
        params = jnp.concatenate([w1f, b1f, w2f, b2f])          # (31,)
        kernel = _generic_kernel

    out2 = pl.pallas_call(
        kernel,
        out_shape=jax.ShapeDtypeStruct((rows, _LANES), jnp.float32),
        grid=(grid,),
        in_specs=[
            pl.BlockSpec(memory_space=pltpu.MemorySpace.SMEM),   # params
            pl.BlockSpec((tile_r, _LANES), lambda i: (i, 0)),    # x tile
        ],
        out_specs=pl.BlockSpec((tile_r, _LANES), lambda i: (i, 0)),
        compiler_params=pltpu.CompilerParams(
            dimension_semantics=("parallel",)),
    )(params, x2)

    if padded:
        return out2.reshape(-1)[:n].reshape(-1, 1)     # slice only when padded
    return out2.reshape(n, 1)                          # pure reshape fast path


def init_params(key):
    """Deterministic parameter init matching nn.Linear shapes."""
    k1, k2, k3, k4 = jax.random.split(key, 4)
    # linear1: in=1 -> bound = 1/sqrt(1) = 1.0
    w1 = jax.random.uniform(k1, (10, 1), jnp.float32, -1.0, 1.0)
    b1 = jax.random.uniform(k2, (10,), jnp.float32, -1.0, 1.0)
    # linear2: in=10 -> bound = 1/sqrt(10)
    bound2 = 1.0 / jnp.sqrt(10.0)
    w2 = jax.random.uniform(k3, (1, 10), jnp.float32, -bound2, bound2)
    b2 = jax.random.uniform(k4, (1,), jnp.float32, -bound2, bound2)
    return w1, b1, w2, b2


def _ref_forward(x, w1, b1, w2, b2):
    return jnp.maximum(x.reshape(-1, 1) @ w1.T + b1, 0.0) @ w2.T + b2


if __name__ == "__main__":
    key = jax.random.PRNGKey(0)
    kx, kp, kx2 = jax.random.split(key, 3)

    w1, b1, w2, b2 = init_params(kp)

    # Main run: small input; forward flattens to (N, 1) like `x.view(-1, 1)`.
    x = jax.random.normal(kx, (2, 4, 16, 16), jnp.float32)   # N = 2048
    out = lmodule_forward(x, w1, b1, w2, b2)
    out = jax.block_until_ready(out)

    ref = _ref_forward(x, w1, b1, w2, b2)
    assert out.shape == (x.size, 1)
    assert jnp.allclose(out, ref, atol=1e-5, rtol=1e-5)

    # Secondary check: exercises the multi-step grid with a ragged last block.
    x_ragged = jax.random.normal(kx2, (20, 128), jnp.float32)  # rows=20, tile=16
    out_r = jax.block_until_ready(lmodule_forward(x_ragged, w1, b1, w2, b2))
    ref_r = _ref_forward(x_ragged, w1, b1, w2, b2)
    assert out_r.shape == (x_ragged.size, 1)
    assert jnp.allclose(out_r, ref_r, atol=1e-5, rtol=1e-5)

    print("KERNEL_OK")
</pallas_src>

<mosaic_0001>
module attributes {stable_mosaic.version = 11 : i64} {
  func.func @kernel(%arg0: i32, %arg1: memref<21xf32, #tpu.memory_space<smem>>, %arg2: memref<8x128xf32, #tpu.memory_space<vmem>>, %arg3: memref<8x128xf32, #tpu.memory_space<vmem>>) attributes {dimension_semantics = [#tpu.dimension_semantics<parallel>], iteration_bounds = array<i64: 2>, scalar_prefetch = 0 : i64, scratch_operands = 0 : i64, tpu.core_type = #tpu.core_type<tc>, window_params = [{transform_indices = @transform_0, window_bounds = array<i64: 21>}, {transform_indices = @transform_1, window_bounds = array<i64: 8, 128>}, {transform_indices = @transform_2, window_bounds = array<i64: 8, 128>}]} {
    %c0 = arith.constant 0 : index
    %c0_0 = arith.constant 0 : index
    %0 = vector.load %arg2[%c0, %c0_0] : memref<8x128xf32, #tpu.memory_space<vmem>>, vector<8x128xf32>
    %c0_1 = arith.constant 0 : index
    %1 = memref.load %arg1[%c0_1] : memref<21xf32, #tpu.memory_space<smem>>
    %2 = vector.broadcast %1 : f32 to vector<8x128xf32>
    %3 = arith.mulf %0, %2 : vector<8x128xf32>
    %c10 = arith.constant 10 : index
    %4 = memref.load %arg1[%c10] : memref<21xf32, #tpu.memory_space<smem>>
    %5 = vector.broadcast %4 : f32 to vector<8x128xf32>
    %6 = arith.addf %3, %5 : vector<8x128xf32>
    %cst = arith.constant 0.000000e+00 : f32
    %7 = vector.broadcast %cst : f32 to vector<8x128xf32>
    %8 = arith.maximumf %6, %7 : vector<8x128xf32>
    %c1 = arith.constant 1 : index
    %9 = memref.load %arg1[%c1] : memref<21xf32, #tpu.memory_space<smem>>
    %10 = vector.broadcast %9 : f32 to vector<8x128xf32>
    %11 = arith.mulf %0, %10 : vector<8x128xf32>
    %c11 = arith.constant 11 : index
    %12 = memref.load %arg1[%c11] : memref<21xf32, #tpu.memory_space<smem>>
    %13 = vector.broadcast %12 : f32 to vector<8x128xf32>
    %14 = arith.addf %11, %13 : vector<8x128xf32>
    %cst_2 = arith.constant 0.000000e+00 : f32
    %15 = vector.broadcast %cst_2 : f32 to vector<8x128xf32>
    %16 = arith.maximumf %14, %15 : vector<8x128xf32>
    %c2 = arith.constant 2 : index
    %17 = memref.load %arg1[%c2] : memref<21xf32, #tpu.memory_space<smem>>
    %18 = vector.broadcast %17 : f32 to vector<8x128xf32>
    %19 = arith.mulf %0, %18 : vector<8x128xf32>
    %c12 = arith.constant 12 : index
    %20 = memref.load %arg1[%c12] : memref<21xf32, #tpu.memory_space<smem>>
    %21 = vector.broadcast %20 : f32 to vector<8x128xf32>
    %22 = arith.addf %19, %21 : vector<8x128xf32>
    %cst_3 = arith.constant 0.000000e+00 : f32
    %23 = vector.broadcast %cst_3 : f32 to vector<8x128xf32>
    %24 = arith.minimumf %22, %23 : vector<8x128xf32>
    %25 = arith.addf %8, %24 : vector<8x128xf32>
    %c3 = arith.constant 3 : index
    %26 = memref.load %arg1[%c3] : memref<21xf32, #tpu.memory_space<smem>>
    %27 = vector.broadcast %26 : f32 to vector<8x128xf32>
    %28 = arith.mulf %0, %27 : vector<8x128xf32>
    %c13 = arith.constant 13 : index
    %29 = memref.load %arg1[%c13] : memref<21xf32, #tpu.memory_space<smem>>
    %30 = vector.broadcast %29 : f32 to vector<8x128xf32>
    %31 = arith.addf %28, %30 : vector<8x128xf32>
    %cst_4 = arith.constant 0.000000e+00 : f32
    %32 = vector.broadcast %cst_4 : f32 to vector<8x128xf32>
    %33 = arith.minimumf %31, %32 : vector<8x128xf32>
    %34 = arith.addf %16, %33 : vector<8x128xf32>
    %c4 = arith.constant 4 : index
    %35 = memref.load %arg1[%c4] : memref<21xf32, #tpu.memory_space<smem>>
    %36 = vector.broadcast %35 : f32 to vector<8x128xf32>
    %37 = arith.mulf %0, %36 : vector<8x128xf32>
    %c14 = arith.constant 14 : index
    %38 = memref.load %arg1[%c14] : memref<21xf32, #tpu.memory_space<smem>>
    %39 = vector.broadcast %38 : f32 to vector<8x128xf32>
    %40 = arith.addf %37, %39 : vector<8x128xf32>
    %cst_5 = arith.constant 0.000000e+00 : f32
    %41 = vector.broadcast %cst_5 : f32 to vector<8x128xf32>
    %42 = arith.minimumf %40, %41 : vector<8x128xf32>
    %43 = arith.addf %25, %42 : vector<8x128xf32>
    %c5 = arith.constant 5 : index
    %44 = memref.load %arg1[%c5] : memref<21xf32, #tpu.memory_space<smem>>
    %45 = vector.broadcast %44 : f32 to vector<8x128xf32>
    %46 = arith.mulf %0, %45 : vector<8x128xf32>
    %c15 = arith.constant 15 : index
    %47 = memref.load %arg1[%c15] : memref<21xf32, #tpu.memory_space<smem>>
    %48 = vector.broadcast %47 : f32 to vector<8x128xf32>
    %49 = arith.addf %46, %48 : vector<8x128xf32>
    %cst_6 = arith.constant 0.000000e+00 : f32
    %50 = vector.broadcast %cst_6 : f32 to vector<8x128xf32>
    %51 = arith.maximumf %49, %50 : vector<8x128xf32>
    %52 = arith.addf %34, %51 : vector<8x128xf32>
    %c6 = arith.constant 6 : index
    %53 = memref.load %arg1[%c6] : memref<21xf32, #tpu.memory_space<smem>>
    %54 = vector.broadcast %53 : f32 to vector<8x128xf32>
    %55 = arith.mulf %0, %54 : vector<8x128xf32>
    %c16 = arith.constant 16 : index
    %56 = memref.load %arg1[%c16] : memref<21xf32, #tpu.memory_space<smem>>
    %57 = vector.broadcast %56 : f32 to vector<8x128xf32>
    %58 = arith.addf %55, %57 : vector<8x128xf32>
    %cst_7 = arith.constant 0.000000e+00 : f32
    %59 = vector.broadcast %cst_7 : f32 to vector<8x128xf32>
    %60 = arith.maximumf %58, %59 : vector<8x128xf32>
    %61 = arith.addf %43, %60 : vector<8x128xf32>
    %c7 = arith.constant 7 : index
    %62 = memref.load %arg1[%c7] : memref<21xf32, #tpu.memory_space<smem>>
    %63 = vector.broadcast %62 : f32 to vector<8x128xf32>
    %64 = arith.mulf %0, %63 : vector<8x128xf32>
    %c17 = arith.constant 17 : index
    %65 = memref.load %arg1[%c17] : memref<21xf32, #tpu.memory_space<smem>>
    %66 = vector.broadcast %65 : f32 to vector<8x128xf32>
    %67 = arith.addf %64, %66 : vector<8x128xf32>
    %cst_8 = arith.constant 0.000000e+00 : f32
    %68 = vector.broadcast %cst_8 : f32 to vector<8x128xf32>
    %69 = arith.minimumf %67, %68 : vector<8x128xf32>
    %70 = arith.addf %52, %69 : vector<8x128xf32>
    %c8 = arith.constant 8 : index
    %71 = memref.load %arg1[%c8] : memref<21xf32, #tpu.memory_space<smem>>
    %72 = vector.broadcast %71 : f32 to vector<8x128xf32>
    %73 = arith.mulf %0, %72 : vector<8x128xf32>
    %c18 = arith.constant 18 : index
    %74 = memref.load %arg1[%c18] : memref<21xf32, #tpu.memory_space<smem>>
    %75 = vector.broadcast %74 : f32 to vector<8x128xf32>
    %76 = arith.addf %73, %75 : vector<8x128xf32>
    %cst_9 = arith.constant 0.000000e+00 : f32
    %77 = vector.broadcast %cst_9 : f32 to vector<8x128xf32>
    %78 = arith.minimumf %76, %77 : vector<8x128xf32>
    %79 = arith.addf %61, %78 : vector<8x128xf32>
    %c9 = arith.constant 9 : index
    %80 = memref.load %arg1[%c9] : memref<21xf32, #tpu.memory_space<smem>>
    %81 = vector.broadcast %80 : f32 to vector<8x128xf32>
    %82 = arith.mulf %0, %81 : vector<8x128xf32>
    %c19 = arith.constant 19 : index
    %83 = memref.load %arg1[%c19] : memref<21xf32, #tpu.memory_space<smem>>
    %84 = vector.broadcast %83 : f32 to vector<8x128xf32>
    %85 = arith.addf %82, %84 : vector<8x128xf32>
    %cst_10 = arith.constant 0.000000e+00 : f32
    %86 = vector.broadcast %cst_10 : f32 to vector<8x128xf32>
    %87 = arith.minimumf %85, %86 : vector<8x128xf32>
    %88 = arith.addf %70, %87 : vector<8x128xf32>
    %89 = arith.addf %79, %88 : vector<8x128xf32>
    %c20 = arith.constant 20 : index
    %90 = memref.load %arg1[%c20] : memref<21xf32, #tpu.memory_space<smem>>
    %91 = vector.broadcast %90 : f32 to vector<8x128xf32>
    %92 = arith.addf %89, %91 : vector<8x128xf32>
    %c0_11 = arith.constant 0 : index
    %c0_12 = arith.constant 0 : index
    %93 = vector.load %arg3[%c0_11, %c0_12] : memref<8x128xf32, #tpu.memory_space<vmem>>, vector<8x128xf32>
    tpu.vector_store %arg3[%c0_11, %c0_12], %92 {strides = array<i32>} : memref<8x128xf32, #tpu.memory_space<vmem>>, vector<8x128xf32>,
    return
  }
  func.func @transform_0(%arg0: i32) -> i32 {
    %c0_i32 = arith.constant 0 : i32
    %c0_i32_0 = arith.constant 0 : i32
    return %c0_i32 : i32
  }
  func.func @transform_1(%arg0: i32) -> (i32, i32) {
    %c0_i32 = arith.constant 0 : i32
    %c0_i32_0 = arith.constant 0 : i32
    return %arg0, %c0_i32 : i32, i32
  }
  func.func @transform_2(%arg0: i32) -> (i32, i32) {
    %c0_i32 = arith.constant 0 : i32
    %c0_i32_0 = arith.constant 0 : i32
    return %arg0, %c0_i32 : i32, i32
  }
}

</mosaic_0001>

<llo_original>
// kernel: tpu_custom_call.1
$region0: #{tpu_custom_call.1}
  #allocation0 [shape = 'u32[]', space=smem, size = 0x4, offset = 0x4, fixed_abs, tag = 'smem constant byte address 0x4 - core index']
  #allocation1 [shape = 'u32[72,128]{1,0:T(1,128)}', space=vmem, size = 0x9000, scoped, tag = 'internal scratch']
  %s0 = inlined_call_operand.hbm [shape: f32[21], index: 0, kind: input, shape index: {}]
  %s1 = inlined_call_operand.hbm [shape: f32[16,128], index: 1, kind: input, shape index: {}]
  %s2 = inlined_call_operand.hbm [shape: f32[16,128], index: 2, kind: output, shape index: {}]
  %s3 = sld [smem:[#allocation0]]
  $region49: #{tpu_custom_call.1} parent=0
    _
  %s5 = ssub.s32 1, %s3
  %s6 = scalar_select 0, %s5, %s3
  $region1: #{tpu_custom_call.1} parent=0
    #allocation2 [shape = 'u8[512]{0}', space=smem, size = 0x200, scoped, tag = 'input window, operand 0, single buffered']
    #allocation3 [shape = 's32[2]{0}', space=sflag, size = 0x8, scoped, tag = 'scoped memory for tpu_custom_call.1']
    #allocation4 [shape = 's32[2]{0}', space=sflag, size = 0x8, scoped, tag = 'scoped memory for tpu_custom_call.1']
    #allocation5 [shape = 's32[2]{0}', space=sflag, size = 0x8, scoped, tag = 'scoped memory for tpu_custom_call.1']
    #allocation6 [shape = 'u8[8192]{0}', space=vmem, size = 0x2000, scoped, tag = 'input window, operand 1']
    #allocation7 [shape = 'u8[8192]{0}', space=vmem, size = 0x2000, scoped, tag = 'output window, operand 0']
    %7 = vsyncpa [#allocation5], 0
    %8 = vsyncpa [#allocation3], 0
    %s9 = scalar_lea.sflag [#allocation3], 1
    %10 = vsyncpa %s9, 0
    %11 = vsyncpa [#allocation4], 0
    %s12 = scalar_lea.sflag [#allocation4], 1
    %13 = vsyncpa %s12, 0
    loop: start=0, step=1, limit=4
    $region2: #{tpu_custom_call.1} parent=1 // loop_pre_header
      _
    $region3: #{tpu_custom_call.1} parent=1 // loop_header
      %s15 = sphi 0, %s19
      %p16 = scmp.ge.s32.totalorder %s15, 4
      %s23 = sphi 0, %s23
      %s25 = sphi 0, %s23
      %s26 = sphi 0, %s25
      %s40 = sphi 0, %s26
      %s46 = sphi 0, %s48
      %s49 = sphi 0, %s46
      %s50 = sphi 0, %s49
      %s66 = sphi 0, %s50
      %s72 = sphi 0, %s74
      %s75 = sphi 0, %s72
      %s76 = sphi 0, %s75
      %s92 = sphi 0, %s76
    $region4: #{tpu_custom_call.1} parent=1 // loop_header_branch
      %18 = sbr.rel (%p16) target = $region8
    $region5: #{tpu_custom_call.1} parent=1 // loop_body
      %s20 = ssub.s32 %s15, 1
      %s21 = ssub.s32 %s15, 2
      %s22 = sadd.s32 %s15, 1
      %s24 = sadd.s32 %s23, 1
      %p27 = scmp.eq.s32.totalorder %s15, 1
      %p28 = scmp.ne.s32.totalorder %s23, %s25
      %p29 = scmp.eq.s32.totalorder %s15, 0
      %p30 = por %p28, %p29
      %p31 = scmp.ne.s32.totalorder %s23, %s25
      %p32 = scmp.eq.s32.totalorder %s20, 1
      %p33 = por %p31, %p32
      %p34 = scmp.ne.s32.totalorder %s25, %s26
      %p35 = scmp.eq.s32.totalorder %s20, 0
      %p36 = por %p34, %p35
      %p37 = scmp.ne.s32.totalorder %s25, %s26
      %p38 = scmp.eq.s32.totalorder %s21, 1
      %p39 = por %p37, %p38
      %p41 = scmp.ne.s32.totalorder %s26, %s40
      %p42 = scmp.eq.s32.totalorder %s21, 0
      %p43 = por %p41, %p42
      %s44 = ssub.s32 %s15, %s22
      %p45 = scmp.eq.s32.totalorder %s44, 0
      %s47 = sadd.s32 %s46, 1
      %s48 = scalar_select %p45, %s46, %s47
      %p51 = pneg %p45
      %p52 = scmp.eq.s32.totalorder %s15, 1
      %p53 = por %p51, %p52
      %p54 = scmp.ne.s32.totalorder %s46, %s49
      %p55 = scmp.eq.s32.totalorder %s15, 0
      %p56 = por %p54, %p55
      %p57 = scmp.ne.s32.totalorder %s46, %s49
      %p58 = scmp.eq.s32.totalorder %s20, 1
      %p59 = por %p57, %p58
      %p60 = scmp.ne.s32.totalorder %s49, %s50
      %p61 = scmp.eq.s32.totalorder %s20, 0
      %p62 = por %p60, %p61
      %p63 = scmp.ne.s32.totalorder %s49, %s50
      %p64 = scmp.eq.s32.totalorder %s21, 1
      %p65 = por %p63, %p64
      %p67 = scmp.ne.s32.totalorder %s50, %s66
      %p68 = scmp.eq.s32.totalorder %s21, 0
      %p69 = por %p67, %p68
      %s70 = ssub.s32 %s15, %s22
      %p71 = scmp.eq.s32.totalorder %s70, 0
      %s73 = sadd.s32 %s72, 1
      %s74 = scalar_select %p71, %s72, %s73
      %p77 = pneg %p71
      %p78 = scmp.eq.s32.totalorder %s15, 1
      %p79 = por %p77, %p78
      %p80 = scmp.ne.s32.totalorder %s72, %s75
      %p81 = scmp.eq.s32.totalorder %s15, 0
      %p82 = por %p80, %p81
      %p83 = scmp.ne.s32.totalorder %s72, %s75
      %p84 = scmp.eq.s32.totalorder %s20, 1
      %p85 = por %p83, %p84
      %p86 = scmp.ne.s32.totalorder %s75, %s76
      %p87 = scmp.eq.s32.totalorder %s20, 0
      %p88 = por %p86, %p87
      %p89 = scmp.ne.s32.totalorder %s75, %s76
      %p90 = scmp.eq.s32.totalorder %s21, 1
      %p91 = por %p89, %p90
      %p93 = scmp.ne.s32.totalorder %s76, %s92
      %p94 = scmp.eq.s32.totalorder %s21, 0
      %p95 = por %p93, %p94
      %p96 = scmp.le.s32.totalorder 1, %s15
      %p97 = scmp.lt.s32.totalorder %s15, 3
      %p98 = pnand %p96, %p97
      %p99 = pneg %p98
      // Predicated region
      $region9: #{tpu_custom_call.1} parent=5 // pred_check
        _
      $region10: #{tpu_custom_call.1} parent=5 // pred_check_branch
        %101 = sbr.rel (%p98) target = $region12
      $region11: #{tpu_custom_call.1} parent=5 // pred_region
        %s102 = ssub.s32 %s15, 1
        // Predicated region
        $region13: #{tpu_custom_call.1} parent=11 // pred_check
          %p103 = pneg %p36
        $region14: #{tpu_custom_call.1} parent=11 // pred_check_branch
          %105 = sbr.rel (%p103) target = $region16
        $region15: #{tpu_custom_call.1} parent=11 // pred_region
          %107 = vsyncadd [#allocation5], 0
          %s109 = sshll.u32 %s0, 4
          %s110 = int_to_ptr.hbm [resolvable:$true] %s109
          %112 = dma.hbm_to_smem %s110, 16, [#allocation2], [#allocation5]
        $region16: #{tpu_custom_call.1} parent=11 // pred_fallthru
          _
      $region12: #{tpu_custom_call.1} parent=5 // pred_fallthru
        _
      %p113 = scmp.lt.s32.totalorder %s15, 2
      // Predicated region
      $region17: #{tpu_custom_call.1} parent=5 // pred_check
        %p114 = pneg %p113
      $region18: #{tpu_custom_call.1} parent=5 // pred_check_branch
        %116 = sbr.rel (%p114) target = $region20
      $region19: #{tpu_custom_call.1} parent=5 // pred_region
        // Predicated region
        $region21: #{tpu_custom_call.1} parent=19 // pred_check
          %p117 = pneg %p56
        $region22: #{tpu_custom_call.1} parent=19 // pred_check_branch
          %119 = sbr.rel (%p117) target = $region24
        $region23: #{tpu_custom_call.1} parent=19 // pred_region
          %s120 = sand.u32 %s46, 1
          %s121 = scalar_lea.sflag [#allocation3], %s120
          %s122 = sand.u32 %s46, 1
          %s123 = smul.addr %s122, 8
          %s124 = scalar_lea.vmem [#allocation6], %s123
          %126 = vsyncadd %s121, 0
          %s127 = smul.addr %s15, 8
          %s128 = scalar_lea.hbm %s1, %s127
          %s130 = sshll.u32 %s128, 4
          %s131 = int_to_ptr.hbm [resolvable:$true] %s130
          %s132 = sshll.u32 %s124, 4
          %s133 = int_to_ptr.vmem [resolvable:$true] %s132
          %135 = dma.hbm_to_vmem [thread:$0]  %s131, 128, %s133, %s121
        $region24: #{tpu_custom_call.1} parent=19 // pred_fallthru
          _
      $region20: #{tpu_custom_call.1} parent=5 // pred_fallthru
        _
      %p136 = scmp.le.s32.totalorder 1, %s15
      %p137 = scmp.lt.s32.totalorder %s15, 3
      %p138 = pnand %p136, %p137
      %p139 = pneg %p138
      // Predicated region
      $region25: #{tpu_custom_call.1} parent=5 // pred_check
        _
      $region26: #{tpu_custom_call.1} parent=5 // pred_check_branch
        %141 = sbr.rel (%p138) target = $region28
      $region27: #{tpu_custom_call.1} parent=5 // pred_region
        %s142 = ssub.s32 %s15, 1
        // Predicated region
        $region29: #{tpu_custom_call.1} parent=27 // pred_check
          %p143 = pneg %p36
        $region30: #{tpu_custom_call.1} parent=27 // pred_check_branch
          %145 = sbr.rel (%p143) target = $region32
        $region31: #{tpu_custom_call.1} parent=27 // pred_region
          %147 = dma.done [#allocation5], 16
        $region32: #{tpu_custom_call.1} parent=27 // pred_fallthru
          _
        %s148 = sand.u32 %s49, 1
        %s149 = scalar_lea.sflag [#allocation3], %s148
        %s150 = sand.u32 %s49, 1
        %s151 = smul.addr %s150, 8
        %s152 = scalar_lea.vmem [#allocation6], %s151
        // Predicated region
        $region33: #{tpu_custom_call.1} parent=27 // pred_check
          %p153 = pneg %p62
        $region34: #{tpu_custom_call.1} parent=27 // pred_check_branch
          %155 = sbr.rel (%p153) target = $region36
        $region35: #{tpu_custom_call.1} parent=27 // pred_region
          %157 = dma.done %s149, 128
        $region36: #{tpu_custom_call.1} parent=27 // pred_fallthru
          _
        %158 = sfence
        %p159 = pneg %p36
        %p160 = pneg %p33
        %s161 = sand.u32 %s49, 1
        %s162 = scalar_lea.sflag [#allocation3], %s161
        %s163 = sand.u32 %s49, 1
        %s164 = smul.addr %s163, 8
        %s165 = scalar_lea.vmem [#allocation6], %s164
        %p166 = pneg %p62
        %p167 = pneg %p59
        %p168 = pneg %p88
        %p169 = pneg %p85
        %s170 = sand.u32 %s75, 1
        %s171 = scalar_lea.sflag [#allocation4], %s170
        %s172 = sand.u32 %s75, 1
        %s173 = smul.addr %s172, 8
        %s174 = scalar_lea.vmem [#allocation7], %s173
        %v175 = vld [vmem:[%s152] sm:$0xff]
        %s176 = sld [smem:[#allocation2]]
        %v177 = vstv %s176
        %v178 = vmul.f32 %v175, %v177
        %s179 = sld [smem:[#allocation2 + $0xa]]
        %v180 = vstv %s179
        %v181 = vadd.f32 %v178, %v180
        %v182 = vmax.f32 %v181, 0.0
        %s183 = sld [smem:[#allocation2 + $0x1]]
        %v184 = vstv %s183
        %v185 = vmul.f32 %v175, %v184
        %s186 = sld [smem:[#allocation2 + $0xb]]
        %v187 = vstv %s186
        %v188 = vadd.f32 %v185, %v187
        %v189 = vmax.f32 %v188, 0.0
        %s190 = sld [smem:[#allocation2 + $0x2]]
        %v191 = vstv %s190
        %v192 = vmul.f32 %v175, %v191
        %s193 = sld [smem:[#allocation2 + $0xc]]
        %v194 = vstv %s193
        %v195 = vadd.f32 %v192, %v194
        %v196 = vmin.f32 %v195, 0.0
        %v197 = vadd.f32 %v182, %v196
        %s198 = sld [smem:[#allocation2 + $0x3]]
        %v199 = vstv %s198
        %v200 = vmul.f32 %v175, %v199
        %s201 = sld [smem:[#allocation2 + $0xd]]
        %v202 = vstv %s201
        %v203 = vadd.f32 %v200, %v202
        %v204 = vmin.f32 %v203, 0.0
        %v205 = vadd.f32 %v189, %v204
        %s206 = sld [smem:[#allocation2 + $0x4]]
        %v207 = vstv %s206
        %v208 = vmul.f32 %v175, %v207
        %s209 = sld [smem:[#allocation2 + $0xe]]
        %v210 = vstv %s209
        %v211 = vadd.f32 %v208, %v210
        %v212 = vmin.f32 %v211, 0.0
        %v213 = vadd.f32 %v197, %v212
        %s214 = sld [smem:[#allocation2 + $0x5]]
        %v215 = vstv %s214
        %v216 = vmul.f32 %v175, %v215
        %s217 = sld [smem:[#allocation2 + $0xf]]
        %v218 = vstv %s217
        %v219 = vadd.f32 %v216, %v218
        %v220 = vmax.f32 %v219, 0.0
        %v221 = vadd.f32 %v205, %v220
        %s222 = sld [smem:[#allocation2 + $0x6]]
        %v223 = vstv %s222
        %v224 = vmul.f32 %v175, %v223
        %s225 = sld [smem:[#allocation2 + $0x10]]
        %v226 = vstv %s225
        %v227 = vadd.f32 %v224, %v226
        %v228 = vmax.f32 %v227, 0.0
        %v229 = vadd.f32 %v213, %v228
        %s230 = sld [smem:[#allocation2 + $0x7]]
        %v231 = vstv %s230
        %v232 = vmul.f32 %v175, %v231
        %s233 = sld [smem:[#allocation2 + $0x11]]
        %v234 = vstv %s233
        %v235 = vadd.f32 %v232, %v234
        %v236 = vmin.f32 %v235, 0.0
        %v237 = vadd.f32 %v221, %v236
        %s238 = sld [smem:[#allocation2 + $0x8]]
        %v239 = vstv %s238
        %v240 = vmul.f32 %v175, %v239
        %s241 = sld [smem:[#allocation2 + $0x12]]
        %v242 = vstv %s241
        %v243 = vadd.f32 %v240, %v242
        %v244 = vmin.f32 %v243, 0.0
        %v245 = vadd.f32 %v229, %v244
        %s246 = sld [smem:[#allocation2 + $0x9]]
        %v247 = vstv %s246
        %v248 = vmul.f32 %v175, %v247
        %s249 = sld [smem:[#allocation2 + $0x13]]
        %v250 = vstv %s249
        %v251 = vadd.f32 %v248, %v250
        %v252 = vmin.f32 %v251, 0.0
        %v253 = vadd.f32 %v237, %v252
        %v254 = vadd.f32 %v245, %v253
        %s255 = sld [smem:[#allocation2 + $0x14]]
        %v256 = vstv %s255
        %v257 = vadd.f32 %v254, %v256
        %258 = vst [vmem:[%s174] sm:$0xff] %v257
        %s259 = sand.u32 %s75, 1
        %s260 = scalar_lea.sflag [#allocation4], %s259
        %s261 = sand.u32 %s75, 1
        %s262 = smul.addr %s261, 8
        %s263 = scalar_lea.vmem [#allocation7], %s262
        // Predicated region
        $region37: #{tpu_custom_call.1} parent=27 // pred_check
          %p264 = pneg %p85
        $region38: #{tpu_custom_call.1} parent=27 // pred_check_branch
          %266 = sbr.rel (%p264) target = $region40
        $region39: #{tpu_custom_call.1} parent=27 // pred_region
          %268 = vsyncadd %s260, 0
          %s269 = smul.addr %s20, 8
          %s270 = scalar_lea.hbm %s2, %s269
          %s272 = sshll.u32 %s263, 4
          %s273 = int_to_ptr.vmem [resolvable:$true] %s272
          %s274 = sshll.u32 %s270, 4
          %s275 = int_to_ptr.hbm [resolvable:$true] %s274
          %277 = dma.vmem_to_hbm [thread:$0]  %s273, 128, %s275, %s260
        $region40: #{tpu_custom_call.1} parent=27 // pred_fallthru
          _
      $region28: #{tpu_custom_call.1} parent=5 // pred_fallthru
        _
      %p278 = scmp.le.s32.totalorder 2, %s15
      // Predicated region
      $region41: #{tpu_custom_call.1} parent=5 // pred_check
        %p279 = pneg %p278
      $region42: #{tpu_custom_call.1} parent=5 // pred_check_branch
        %281 = sbr.rel (%p279) target = $region44
      $region43: #{tpu_custom_call.1} parent=5 // pred_region
        %s282 = ssub.s32 %s15, 2
        // Predicated region
        $region45: #{tpu_custom_call.1} parent=43 // pred_check
          %p283 = pneg %p91
        $region46: #{tpu_custom_call.1} parent=43 // pred_check_branch
          %285 = sbr.rel (%p283) target = $region48
        $region47: #{tpu_custom_call.1} parent=43 // pred_region
          %s286 = sand.u32 %s76, 1
          %s287 = scalar_lea.sflag [#allocation4], %s286
          %s288 = sand.u32 %s76, 1
          %s289 = smul.addr %s288, 8
          %s290 = scalar_lea.vmem [#allocation7], %s289
          %292 = dma.done %s287, 128
        $region48: #{tpu_custom_call.1} parent=43 // pred_fallthru
          _
      $region44: #{tpu_custom_call.1} parent=5 // pred_fallthru
        _
    $region6: #{tpu_custom_call.1} parent=1 // loop_footer
      %s19 = sadd.s32 1, %s15
    $region7: #{tpu_custom_call.1} parent=1 // loop_footer_branch
      %14 = sbr.rel target = $region3
    $region8: #{tpu_custom_call.1} parent=1 // loop_exit
      _
    %293 = vsyncpa [#allocation3], 1
    %s294 = scalar_lea.sflag [#allocation3], 1
    %295 = vsyncpa %s294, 1
    %296 = vsyncpa [#allocation4], 1
    %s297 = scalar_lea.sflag [#allocation4], 1
    %298 = vsyncpa %s297, 1
    %299 = vsyncpa [#allocation5], 1
    %s300 = scalar_lea.sflag [#allocation5], 1
    %301 = vsyncpa %s300, 1

</llo_original>
